<compile_context>
chip_gen: v5e
topology: v5e:2x2
jax: 0.10.0
libtpu: 0.0.40
codegen_flags: <defaults>
</compile_context>

<pallas_src>
import jax
import jax.numpy as jnp
from jax import lax
from jax.experimental import pallas as pl
from jax.experimental.pallas import tpu as pltpu

BN_EPS = 1e-5
EXTRA_ROWS = 4  # gamma, beta, w2-row, b2


def fc_kernel(x_ref, p_ref, o_ref):
    hdim = p_ref.shape[0] - EXTRA_ROWS

    x = x_ref[...]                       # (N, C) f32
    w1t = p_ref[0:hdim, :]               # (H, C) f32, lane-dense

    # Linear 1 on the MXU (f32 operands, f32 accumulation). Contract the C axis
    # of x with the C axis of w1^T -> (N, H). The Linear-1 bias is intentionally
    # omitted: it is cancelled exactly by the BatchNorm mean subtraction below.
    h = lax.dot_general(
        x, w1t,
        dimension_numbers=(((1,), (1,)), ((), ())),
        preferred_element_type=jnp.float32,
    )                                    # (N, H)

    # BatchNorm1d, training mode: stats over the batch axis, biased variance.
    mean = jnp.mean(h, axis=0, keepdims=True)          # (1, H)
    diff = h - mean
    var = jnp.mean(diff * diff, axis=0, keepdims=True)  # (1, H)

    gamma = p_ref[hdim:hdim + 1, :hdim]                 # (1, H) (pad lanes excluded)
    beta = p_ref[hdim + 1:hdim + 2, :hdim]              # (1, H)
    h = diff * lax.rsqrt(var + BN_EPS) * gamma + beta

    # ReLU (VPU)
    h = jnp.maximum(h, 0.0)

    # Linear 2 (H -> 1) as a lane reduce; an (N,20)x(20,1) MXU pass would be
    # <0.1% utilized and pay MXU push + result-FIFO pop latency.
    w2row = p_ref[hdim + 2:hdim + 3, :hdim]             # (1, H)
    b2 = p_ref[hdim + 3:hdim + 4, 0:1]                  # (1, 1)
    out = jnp.sum(h * w2row, axis=-1, keepdims=True) + b2
    o_ref[...] = out.astype(o_ref.dtype)


def pack_params(w1, gamma, beta, w2, b2):
    """One-time packing of all static parameters into a single lane-dense slab.

    Rows 0..H-1: w1^T (H, C); row H: gamma; row H+1: beta; row H+2: w2 row;
    row H+3: b2 at lane 0. All vectors zero-padded to C lanes.
    """
    c, hdim = w1.shape
    assert w2.shape == (hdim, 1), "lane-reduce path assumes output width 1"

    def pad_row(v):
        v = v.reshape(1, -1).astype(jnp.float32)
        return jnp.pad(v, ((0, 0), (0, c - v.shape[1])))

    return jnp.concatenate(
        [
            w1.T.astype(jnp.float32),   # (H, C)
            pad_row(gamma),             # row H
            pad_row(beta),              # row H+1
            pad_row(w2.T),              # row H+2
            pad_row(b2),                # row H+3
        ],
        axis=0,
    )                                   # (H+4, C)


def fc_forward(x, packed_params):
    """Single-instance forward. `packed_params` = pack_params(...) (precomputed)."""
    n, c = x.shape
    p_rows = packed_params.shape[0]
    full = lambda shape: pl.BlockSpec(shape, lambda: tuple(0 for _ in shape))
    return pl.pallas_call(
        fc_kernel,
        out_shape=jax.ShapeDtypeStruct((n, 1), jnp.float32),
        grid=(),
        in_specs=[full((n, c)), full((p_rows, c))],   # exactly two input DMAs
        out_specs=full((n, 1)),
    )(x, packed_params)


def fc_forward_batched(x, packed_params):
    """Many independent instances under ONE pallas_call.

    x: (num_instances, N, C). Weight slab stays VMEM-resident (same block every
    step); the instance axis is "parallel" so v7x megacore can shard it.
    """
    num_inst, n, c = x.shape
    p_rows = packed_params.shape[0]
    return pl.pallas_call(
        fc_kernel,
        out_shape=jax.ShapeDtypeStruct((num_inst, n, 1), jnp.float32),
        grid=(num_inst,),
        in_specs=[
            pl.BlockSpec((None, n, c), lambda i: (i, 0, 0)),
            pl.BlockSpec((p_rows, c), lambda i: (0, 0)),
        ],
        out_specs=pl.BlockSpec((None, n, 1), lambda i: (i, 0, 0)),
        compiler_params=pltpu.CompilerParams(dimension_semantics=("parallel",)),
    )(x, packed_params)


def init_params(key, input_channel=512, hidden=20, output=1):
    """Deterministic PyTorch-style init: U(-1/sqrt(fan_in), 1/sqrt(fan_in))."""
    k1, k2, k3, k4 = jax.random.split(key, 4)
    bound1 = 1.0 / jnp.sqrt(input_channel)
    bound2 = 1.0 / jnp.sqrt(hidden)
    w1 = jax.random.uniform(k1, (input_channel, hidden), jnp.float32, -bound1, bound1)
    b1 = jax.random.uniform(k2, (1, hidden), jnp.float32, -bound1, bound1)
    gamma = jnp.ones((1, hidden), jnp.float32)   # BatchNorm1d weight
    beta = jnp.zeros((1, hidden), jnp.float32)   # BatchNorm1d bias
    w2 = jax.random.uniform(k3, (hidden, output), jnp.float32, -bound2, bound2)
    b2 = jax.random.uniform(k4, (1, output), jnp.float32, -bound2, bound2)
    return w1, b1, gamma, beta, w2, b2


def fc_reference(x, w1, b1, gamma, beta, w2, b2):
    """Pure-JAX reference including the (mathematically cancelled) b1."""
    h = x @ w1 + b1
    mean = jnp.mean(h, axis=0, keepdims=True)
    var = jnp.mean((h - mean) ** 2, axis=0, keepdims=True)
    h = (h - mean) / jnp.sqrt(var + BN_EPS) * gamma + beta
    h = jnp.maximum(h, 0.0)
    return h @ w2 + b2


if __name__ == "__main__":
    key = jax.random.PRNGKey(0)
    kx, kp, kb = jax.random.split(key, 3)

    N, C, H, O = 8, 512, 20, 1
    x = jax.random.normal(kx, (N, C), jnp.float32)
    w1, b1, gamma, beta, w2, b2 = init_params(kp, input_channel=C, hidden=H, output=O)

    # One-time packing (hoisted out of the forward path).
    packed = jax.block_until_ready(pack_params(w1, gamma, beta, w2, b2))

    # Single-instance call (grid=(), whole problem VMEM-resident, 2 input DMAs).
    out = jax.block_until_ready(fc_forward(x, packed))
    ref = fc_reference(x, w1, b1, gamma, beta, w2, b2)
    assert out.shape == (N, O), out.shape
    assert jnp.allclose(out, ref, atol=1e-4, rtol=1e-4), (
        f"max abs err {jnp.max(jnp.abs(out - ref))}"
    )

    # Batched structural path: 4 independent instances, one pallas_call.
    I = 4
    xb = jax.random.normal(kb, (I, N, C), jnp.float32)
    outb = jax.block_until_ready(fc_forward_batched(xb, packed))
    refb = jnp.stack([fc_reference(xb[i], w1, b1, gamma, beta, w2, b2) for i in range(I)])
    assert outb.shape == (I, N, O), outb.shape
    assert jnp.allclose(outb, refb, atol=1e-4, rtol=1e-4), (
        f"max abs err {jnp.max(jnp.abs(outb - refb))}"
    )

    print("KERNEL_OK")
</pallas_src>

<mosaic_0001>
module attributes {stable_mosaic.version = 11 : i64} {
  func.func @fc_kernel(%arg0: memref<8x512xf32, #tpu.memory_space<vmem>>, %arg1: memref<24x512xf32, #tpu.memory_space<vmem>>, %arg2: memref<8x1xf32, #tpu.memory_space<vmem>>) attributes {dimension_semantics = [], scalar_prefetch = 0 : i64, scratch_operands = 0 : i64, tpu.core_type = #tpu.core_type<tc>} {
    %c0 = arith.constant 0 : index
    %c0_0 = arith.constant 0 : index
    %0 = vector.load %arg0[%c0, %c0_0] : memref<8x512xf32, #tpu.memory_space<vmem>>, vector<8x512xf32>
    %c0_1 = arith.constant 0 : index
    %c0_2 = arith.constant 0 : index
    %1 = vector.load %arg1[%c0_1, %c0_2] : memref<24x512xf32, #tpu.memory_space<vmem>>, vector<20x512xf32>
    %cst = arith.constant dense<0.000000e+00> : vector<8x20xf32>
    %2 = tpu.matmul %0, %1, %cst {dimension_numbers = #tpu.dot_dimension_numbers<[1], [1], [0], [0], [0, 0, 1, 0], [], []>} : vector<8x512xf32>, vector<20x512xf32>, vector<8x20xf32> -> vector<8x20xf32>
    %cst_3 = arith.constant dense<0.000000e+00> : vector<20xf32>
    %3 = vector.multi_reduction <add>, %2, %cst_3 [0] : vector<8x20xf32> to vector<20xf32>
    %4 = vector.shape_cast %3 : vector<20xf32> to vector<1x20xf32>
    %cst_4 = arith.constant 8.000000e+00 : f32
    %5 = vector.broadcast %cst_4 : f32 to vector<1x20xf32>
    %6 = arith.divf %4, %5 : vector<1x20xf32>
    %7 = vector.broadcast %6 : vector<1x20xf32> to vector<8x20xf32>
    %8 = arith.subf %2, %7 : vector<8x20xf32>
    %9 = arith.mulf %8, %8 : vector<8x20xf32>
    %cst_5 = arith.constant dense<0.000000e+00> : vector<20xf32>
    %10 = vector.multi_reduction <add>, %9, %cst_5 [0] : vector<8x20xf32> to vector<20xf32>
    %11 = vector.shape_cast %10 : vector<20xf32> to vector<1x20xf32>
    %cst_6 = arith.constant 8.000000e+00 : f32
    %12 = vector.broadcast %cst_6 : f32 to vector<1x20xf32>
    %13 = arith.divf %11, %12 : vector<1x20xf32>
    %c20 = arith.constant 20 : index
    %c0_7 = arith.constant 0 : index
    %14 = vector.load %arg1[%c20, %c0_7] : memref<24x512xf32, #tpu.memory_space<vmem>>, vector<1x20xf32>
    %c21 = arith.constant 21 : index
    %c0_8 = arith.constant 0 : index
    %15 = vector.load %arg1[%c21, %c0_8] : memref<24x512xf32, #tpu.memory_space<vmem>>, vector<1x20xf32>
    %cst_9 = arith.constant 9.99999974E-6 : f32
    %16 = vector.broadcast %cst_9 : f32 to vector<1x20xf32>
    %17 = arith.addf %13, %16 : vector<1x20xf32>
    %18 = math.rsqrt %17 : vector<1x20xf32>
    %19 = vector.broadcast %18 : vector<1x20xf32> to vector<8x20xf32>
    %20 = arith.mulf %8, %19 : vector<8x20xf32>
    %21 = vector.broadcast %14 : vector<1x20xf32> to vector<8x20xf32>
    %22 = arith.mulf %20, %21 : vector<8x20xf32>
    %23 = vector.broadcast %15 : vector<1x20xf32> to vector<8x20xf32>
    %24 = arith.addf %22, %23 : vector<8x20xf32>
    %cst_10 = arith.constant 0.000000e+00 : f32
    %25 = vector.broadcast %cst_10 : f32 to vector<8x20xf32>
    %26 = arith.maximumf %24, %25 : vector<8x20xf32>
    %c22 = arith.constant 22 : index
    %c0_11 = arith.constant 0 : index
    %27 = vector.load %arg1[%c22, %c0_11] : memref<24x512xf32, #tpu.memory_space<vmem>>, vector<1x20xf32>
    %c23 = arith.constant 23 : index
    %c0_12 = arith.constant 0 : index
    %28 = vector.load %arg1[%c23, %c0_12] : memref<24x512xf32, #tpu.memory_space<vmem>>, vector<1x1xf32>
    %29 = vector.broadcast %27 : vector<1x20xf32> to vector<8x20xf32>
    %30 = arith.mulf %26, %29 : vector<8x20xf32>
    %cst_13 = arith.constant dense<0.000000e+00> : vector<8xf32>
    %31 = vector.multi_reduction <add>, %30, %cst_13 [1] : vector<8x20xf32> to vector<8xf32>
    %32 = vector.shape_cast %31 : vector<8xf32> to vector<8x1xf32>
    %33 = vector.broadcast %28 : vector<1x1xf32> to vector<8x1xf32>
    %34 = arith.addf %32, %33 : vector<8x1xf32>
    %c0_14 = arith.constant 0 : index
    %c0_15 = arith.constant 0 : index
    %35 = vector.load %arg2[%c0_14, %c0_15] : memref<8x1xf32, #tpu.memory_space<vmem>>, vector<8x1xf32>
    tpu.vector_store %arg2[%c0_14, %c0_15], %34 {strides = array<i32>} : memref<8x1xf32, #tpu.memory_space<vmem>>, vector<8x1xf32>,
    return
  }
}

</mosaic_0001>

<llo_original>
// kernel: tpu_custom_call.1
$region0: #{tpu_custom_call.1}
  #allocation0 [shape = 'u32[]', space=smem, size = 0x4, offset = 0x4, fixed_abs, tag = 'smem constant byte address 0x4 - core index']
  #allocation1 [shape = 'u32[72,128]{1,0:T(1,128)}', space=vmem, size = 0x9000, scoped, tag = 'internal scratch']
  %s0 = inlined_call_operand.hbm [shape: f32[8,512], index: 0, kind: input, shape index: {}]
  %s1 = inlined_call_operand.hbm [shape: f32[24,512], index: 1, kind: input, shape index: {}]
  %s2 = inlined_call_operand.vmem [shape: f32[8,1], index: 2, kind: output, shape index: {}]
  %s3 = sld [smem:[#allocation0]]
  $region26: #{tpu_custom_call.1} parent=0
    _
  %s5 = ssub.s32 1, %s3
  %s6 = scalar_select 0, %s5, %s3
  $region1: #{tpu_custom_call.1} parent=0
    #allocation2 [shape = 'u8[16384]{0}', space=vmem, size = 0x4000, scoped, tag = 'input window, operand 0, single buffered']
    #allocation3 [shape = 's32[1]{0}', space=sflag, size = 0x4, scoped, tag = 'scoped memory for tpu_custom_call.1']
    #allocation4 [shape = 'u8[49152]{0}', space=vmem, size = 0xc000, scoped, tag = 'input window, operand 1, single buffered']
    #allocation5 [shape = 's32[1]{0}', space=sflag, size = 0x4, scoped, tag = 'scoped memory for tpu_custom_call.1']
    %7 = vsyncpa [#allocation3], 0
    %8 = vsyncpa [#allocation5], 0
    // Predicated region
    $region2: #{tpu_custom_call.1} parent=1 // pred_check
      _
    $region3: #{tpu_custom_call.1} parent=1 // pred_check_branch
      %10 = sbr.rel (0) target = $region5
    $region4: #{tpu_custom_call.1} parent=1 // pred_region
      %12 = vsyncadd [#allocation3], 0
      %s14 = sshll.u32 %s0, 4
      %s15 = int_to_ptr.hbm [resolvable:$true] %s14
      %s16 = sshll.u32 [#allocation2], 4
      %s17 = int_to_ptr.vmem [resolvable:$true] %s16
      %19 = dma.hbm_to_vmem [thread:$0]  %s15, 512, %s17, [#allocation3]
    $region5: #{tpu_custom_call.1} parent=1 // pred_fallthru
      _
    // Predicated region
    $region6: #{tpu_custom_call.1} parent=1 // pred_check
      _
    $region7: #{tpu_custom_call.1} parent=1 // pred_check_branch
      %21 = sbr.rel (0) target = $region9
    $region8: #{tpu_custom_call.1} parent=1 // pred_region
      %23 = vsyncadd [#allocation5], 0
      %s24 = sshll.u32 %s1, 4
      %s25 = int_to_ptr.hbm [resolvable:$true] %s24
      %s26 = sshll.u32 [#allocation4], 4
      %s27 = int_to_ptr.vmem [resolvable:$true] %s26
      %32 = dma.hbm_to_vmem [thread:$0]  %s25, 1536, %s27, [#allocation5], 512, 512, 32
    $region9: #{tpu_custom_call.1} parent=1 // pred_fallthru
      _
    // Predicated region
    $region10: #{tpu_custom_call.1} parent=1 // pred_check
      _
    $region11: #{tpu_custom_call.1} parent=1 // pred_check_branch
      %34 = sbr.rel (0) target = $region13
    $region12: #{tpu_custom_call.1} parent=1 // pred_region
      %36 = dma.done [#allocation3], 512
    $region13: #{tpu_custom_call.1} parent=1 // pred_fallthru
      _
    // Predicated region
    $region14: #{tpu_custom_call.1} parent=1 // pred_check
      _
    $region15: #{tpu_custom_call.1} parent=1 // pred_check_branch
      %38 = sbr.rel (0) target = $region17
    $region16: #{tpu_custom_call.1} parent=1 // pred_region
      %40 = dma.done [#allocation5], 1536
    $region17: #{tpu_custom_call.1} parent=1 // pred_fallthru
      _
    %v41 = vld [vmem:[#allocation2] sm:$0xff]
    %v42 = vld [vmem:[#allocation2 + $0x8] sm:$0xff]
    %v43 = vld [vmem:[#allocation2 + $0x10] sm:$0xff]
    %v44 = vld [vmem:[#allocation2 + $0x18] sm:$0xff]
    %v45 = vld [vmem:[#allocation4] sm:$0xff]
    %v46 = vld [vmem:[#allocation4 + $0x8] sm:$0xff]
    %v47 = vld [vmem:[#allocation4 + $0x10] sm:$0xff]
    %v48 = vld [vmem:[#allocation4 + $0x18] sm:$0xff]
    %v49 = vld [vmem:[#allocation4 + $0x20] sm:$0xff]
    %v50 = vld [vmem:[#allocation4 + $0x28] sm:$0xff]
    %v51 = vld [vmem:[#allocation4 + $0x30] sm:$0xff]
    %v52 = vld [vmem:[#allocation4 + $0x38] sm:$0xff]
    %v53 = vld [vmem:[#allocation4 + $0x40] sm:$0xf]
    %v54 = vld [vmem:[#allocation4 + $0x48] sm:$0xf]
    %v55 = vld [vmem:[#allocation4 + $0x50] sm:$0xf]
    %v56 = vld [vmem:[#allocation4 + $0x58] sm:$0xf]
    %57 = vmatpush.xpose.msra.mxu0 0.0
    %58 = vmatpush.xpose.msra.mxu0 0.0
    %59 = vmatpush.xpose.msra.mxu0 0.0
    %60 = vmatpush.xpose.msra.mxu0 0.0
    %61 = vmatpush.xpose.msra.mxu0 0.0
    %62 = vmatpush.xpose.msra.mxu0 0.0
    %63 = vmatpush.xpose.msra.mxu0 0.0
    %64 = vmatpush.xpose.msra.mxu0 0.0
    %65 = vmatpush.xpose.msra.mxu0 0.0
    %66 = vmatpush.xpose.msra.mxu0 0.0
    %67 = vmatpush.xpose.msra.mxu0 0.0
    %68 = vmatpush.xpose.msra.mxu0 0.0
    %69 = vmatpush.xpose.msra.mxu0 0.0
    %70 = vmatpush.xpose.msra.mxu0 %v53
    %71 = vmatpush.xpose.msra.mxu0 %v49
    %72 = vmatpush.xpose.msra.mxu0 %v45
    %73 = vmatmul.f32.gmra.mxu0 %v41
    %v74 = vpop.f32.mrf.mxu0
    %v75 = vadd.f32 0.0, %v74
    %76 = vdwg.mxu0
    %77 = vmatpush.xpose.msra.mxu0 0.0
    %78 = vmatpush.xpose.msra.mxu0 0.0
    %79 = vmatpush.xpose.msra.mxu0 0.0
    %80 = vmatpush.xpose.msra.mxu0 0.0
    %81 = vmatpush.xpose.msra.mxu0 0.0
    %82 = vmatpush.xpose.msra.mxu0 0.0
    %83 = vmatpush.xpose.msra.mxu0 0.0
    %84 = vmatpush.xpose.msra.mxu0 0.0
    %85 = vmatpush.xpose.msra.mxu0 0.0
    %86 = vmatpush.xpose.msra.mxu0 0.0
    %87 = vmatpush.xpose.msra.mxu0 0.0
    %88 = vmatpush.xpose.msra.mxu0 0.0
    %89 = vmatpush.xpose.msra.mxu0 0.0
    %90 = vmatpush.xpose.msra.mxu0 %v54
    %91 = vmatpush.xpose.msra.mxu0 %v50
    %92 = vmatpush.xpose.msra.mxu0 %v46
    %93 = vmatmul.f32.gmra.mxu0 %v42
    %v94 = vpop.f32.mrf.mxu0
    %v95 = vadd.f32 %v75, %v94
    %96 = vdwg.mxu0
    %97 = vmatpush.xpose.msra.mxu0 0.0
    %98 = vmatpush.xpose.msra.mxu0 0.0
    %99 = vmatpush.xpose.msra.mxu0 0.0
    %100 = vmatpush.xpose.msra.mxu0 0.0
    %101 = vmatpush.xpose.msra.mxu0 0.0
    %102 = vmatpush.xpose.msra.mxu0 0.0
    %103 = vmatpush.xpose.msra.mxu0 0.0
    %104 = vmatpush.xpose.msra.mxu0 0.0
    %105 = vmatpush.xpose.msra.mxu0 0.0
    %106 = vmatpush.xpose.msra.mxu0 0.0
    %107 = vmatpush.xpose.msra.mxu0 0.0
    %108 = vmatpush.xpose.msra.mxu0 0.0
    %109 = vmatpush.xpose.msra.mxu0 0.0
    %110 = vmatpush.xpose.msra.mxu0 %v55
    %111 = vmatpush.xpose.msra.mxu0 %v51
    %112 = vmatpush.xpose.msra.mxu0 %v47
    %113 = vmatmul.f32.gmra.mxu0 %v43
    %v114 = vpop.f32.mrf.mxu0
    %v115 = vadd.f32 %v95, %v114
    %116 = vdwg.mxu0
    %117 = vmatpush.xpose.msra.mxu0 0.0
    %118 = vmatpush.xpose.msra.mxu0 0.0
    %119 = vmatpush.xpose.msra.mxu0 0.0
    %120 = vmatpush.xpose.msra.mxu0 0.0
    %121 = vmatpush.xpose.msra.mxu0 0.0
    %122 = vmatpush.xpose.msra.mxu0 0.0
    %123 = vmatpush.xpose.msra.mxu0 0.0
    %124 = vmatpush.xpose.msra.mxu0 0.0
    %125 = vmatpush.xpose.msra.mxu0 0.0
    %126 = vmatpush.xpose.msra.mxu0 0.0
    %127 = vmatpush.xpose.msra.mxu0 0.0
    %128 = vmatpush.xpose.msra.mxu0 0.0
    %129 = vmatpush.xpose.msra.mxu0 0.0
    %130 = vmatpush.xpose.msra.mxu0 %v56
    %131 = vmatpush.xpose.msra.mxu0 %v52
    %132 = vmatpush.xpose.msra.mxu0 %v48
    %133 = vmatmul.f32.gmra.mxu0 %v44
    %v134 = vpop.f32.mrf.mxu0
    %v135 = vadd.f32 %v115, %v134
    %136 = vdwg.mxu0
    %vm137 = vcmask 162816
    %v138 = vsel %vm137, %v135, 0.0
    %v139 = vrot.slane %v138, 4
    %v140 = vadd.f32 %v138, %v139
    %v141 = vrot.slane %v140, 2
    %v142 = vadd.f32 %v140, %v141
    %v143 = vrot.slane %v142, 1
    %v144 = vadd.f32 %v142, %v143
    %v145 = vrcp.pop 8.0
    %v146 = vmul.f32 8.0, %v145
    %v147 = vsub.f32 1.0, %v146
    %v148 = vmul.f32 %v145, %v147
    %v149 = vadd.f32 %v145, %v148
    %vm150 = vweird.f32 %v145
    %v151 = vsel %vm150, %v145, %v149
    %v152 = vmul.f32 %v144, %v151
    %v153 = vsub.f32 %v135, %v152
    %v154 = vmul.f32 %v153, %v153
    %v155 = vsel %vm137, %v154, 0.0
    %v156 = vrot.slane %v155, 4
    %v157 = vadd.f32 %v155, %v156
    %v158 = vrot.slane %v157, 2
    %v159 = vadd.f32 %v157, %v158
    %v160 = vrot.slane %v159, 1
    %v161 = vadd.f32 %v159, %v160
    %v162 = vmul.f32 %v161, %v151
    %v163 = vld [vmem:[#allocation4 + $0x44] ss:$0 sm:$0xff]
    %v164 = vld [vmem:[#allocation4 + $0x45] ss:$0 sm:$0xff]
    %v165 = vadd.f32 %v162, 1e-05
    %v166 = vrsqrt.pop %v165
    %v167 = vmul.f32 %v166, %v165
    %v168 = vmul.f32 %v167, %v166
    %v169 = vmul.f32 0.5, %v168
    %v170 = vsub.f32 1.5, %v169
    %v171 = vmul.f32 %v166, %v170
    %vm172 = vweird.f32 %v165
    %vm173 = vweird.f32 %v166
    %vm174 = vmor %vm172, %vm173
    %v175 = vsel %vm174, %v166, %v171
    %v176 = vmul.f32 %v153, %v175
    %v177 = vmul.f32 %v176, %v163
    %v178 = vadd.f32 %v177, %v164
    %v179 = vmax.f32 %v178, 0.0
    %v180 = vld [vmem:[#allocation4 + $0x46] ss:$0 sm:$0xff]
    %v181 = vld [vmem:[#allocation4 + $0x47] ss:$0 sm:$0xff]
    %v182 = vmul.f32 %v179, %v180
    %v183 = vsel %vm137, %v182, 0.0
    %184 = vadd.xlane.f32.xlu0 %v183
    %v185 = vpop.xlane.xlu0 %184
    %v186 = vadd.f32 %v185, %v181
    %vm187 = vcmask 7168
    %188 = vst.msk [vmem:[%s2] sm:$0xff] %vm187, %v186
    // Predicated region
    $region18: #{tpu_custom_call.1} parent=1 // pred_check
      _
    $region19: #{tpu_custom_call.1} parent=1 // pred_check_branch
      %190 = sbr.rel (0) target = $region21
    $region20: #{tpu_custom_call.1} parent=1 // pred_region
      _
    $region21: #{tpu_custom_call.1} parent=1 // pred_fallthru
      _
    // Predicated region
    $region22: #{tpu_custom_call.1} parent=1 // pred_check
      _
    $region23: #{tpu_custom_call.1} parent=1 // pred_check_branch
      %192 = sbr.rel (0) target = $region25
    $region24: #{tpu_custom_call.1} parent=1 // pred_region
      _
    $region25: #{tpu_custom_call.1} parent=1 // pred_fallthru
      _
    %193 = vsyncpa [#allocation3], 1
    %194 = vsyncpa [#allocation5], 1

</llo_original>
